<compile_context>
chip_gen: v7x
topology: tpu7x:2x2x1
jax: 0.10.0
libtpu: 0.0.40
codegen_flags: <defaults>
</compile_context>

<pallas_src>
import functools

import jax
import jax.numpy as jnp
from jax.experimental import pallas as pl
from jax.experimental.pallas import tpu as pltpu


def _round_up(x: int, m: int) -> int:
    return ((x + m - 1) // m) * m


def mlp_kernel(x_ref, w1_ref, b1_ref, w2_ref, b2_ref, w3_ref, b3_ref, o_ref):
    # Cast activations to bf16 on-chip (VPU) right before the MXU; all matmuls
    # accumulate in f32, bias + ReLU epilogue stays in f32.
    x = x_ref[...].astype(jnp.bfloat16)
    h = jnp.dot(x, w1_ref[...], preferred_element_type=jnp.float32)
    h = jnp.maximum(h + b1_ref[...], 0.0).astype(jnp.bfloat16)
    h = jnp.dot(h, w2_ref[...], preferred_element_type=jnp.float32)
    h = jnp.maximum(h + b2_ref[...], 0.0).astype(jnp.bfloat16)
    h = jnp.dot(h, w3_ref[...], preferred_element_type=jnp.float32)
    o_ref[...] = jnp.maximum(h + b3_ref[...], 0.0).astype(o_ref.dtype)


def prepare_params(w1, b1, w2, b2, w3, b3):
    """One-time parameter prep (outside the per-step path).

    Weights -> bf16 MXU operands, biases -> (1, N) f32 rows.  Doing this once
    keeps the wrapper-side HBM cast passes off the steady-state latency path.
    """
    bf16, f32 = jnp.bfloat16, jnp.float32
    return (
        w1.astype(bf16), b1.reshape(1, -1).astype(f32),
        w2.astype(bf16), b2.reshape(1, -1).astype(f32),
        w3.astype(bf16), b3.reshape(1, -1).astype(f32),
    )


def _choose_tm(B: int, in_dim: int, out_dim: int) -> int:
    """Batch tile: large (amortizes ~0.35us/step), 16-aligned, >=2 tiles when
    possible (v7x megacore), and bounded so double-buffered f32 x/out tiles
    stay within a modest VMEM budget even for very wide inputs."""
    if B <= 16:
        return _round_up(B, 8)
    bytes_per_row = 4 * (in_dim + out_dim)
    byte_cap = max(8, ((8 << 20) // max(bytes_per_row, 1)) // 8 * 8)
    tm = min(1024, byte_cap, _round_up(-(-B // 2), 16))
    return max(tm, 8)


@jax.jit
def neural_network_forward(x, w1, b1, w2, b2, w3, b3):
    """Fused 3-layer MLP forward.

    x:   (B, in_dim)   float32
    w_i: (fan_in, fan_out) bfloat16   (prepared via prepare_params)
    b_i: (1, fan_out)  float32
    Returns (B, out_dim) float32.
    """
    B, in_dim = x.shape
    h1_dim = w1.shape[1]
    h2_dim = w2.shape[1]
    out_dim = w3.shape[1]
    f32 = jnp.float32

    TM = _choose_tm(B, in_dim, out_dim)
    grid = (pl.cdiv(B, TM),)

    # Resident params: same block every grid step -> DMA'd once, VMEM-resident.
    resident = lambda shape: pl.BlockSpec(shape, lambda i: (0, 0))

    # VMEM budget: double-buffered x/out tiles + double-buffered resident
    # params + generous room for in-kernel f32/bf16 temporaries.
    resident_bytes = 2 * (
        (w1.size + w2.size + w3.size) * 2
        + (b1.size + b2.size + b3.size) * 4
    )
    tile_bytes = 2 * TM * (in_dim + out_dim) * 4
    temp_bytes = 4 * TM * (h1_dim + h2_dim + out_dim) * 4
    vmem_limit = int(
        min(100 << 20, max(16 << 20, 2 * (resident_bytes + tile_bytes + temp_bytes)))
    )

    flops = 2 * B * (in_dim * h1_dim + h1_dim * h2_dim + h2_dim * out_dim)
    bytes_accessed = (
        x.size * 4
        + (w1.size + w2.size + w3.size) * 2
        + (b1.size + b2.size + b3.size) * 4
        + B * out_dim * 4
    )

    out = pl.pallas_call(
        mlp_kernel,
        out_shape=jax.ShapeDtypeStruct((B, out_dim), f32),
        grid=grid,
        in_specs=[
            pl.BlockSpec((TM, in_dim), lambda i: (i, 0)),  # x tile (pipelined)
            resident((in_dim, h1_dim)),
            resident((1, h1_dim)),
            resident((h1_dim, h2_dim)),
            resident((1, h2_dim)),
            resident((h2_dim, out_dim)),
            resident((1, out_dim)),
        ],
        out_specs=pl.BlockSpec((TM, out_dim), lambda i: (i, 0)),
        compiler_params=pltpu.CompilerParams(
            dimension_semantics=("parallel",),
            vmem_limit_bytes=vmem_limit,
        ),
        cost_estimate=pl.CostEstimate(
            flops=flops, transcendentals=0, bytes_accessed=bytes_accessed
        ),
    )(x, w1, b1, w2, b2, w3, b3)

    return out


def _init_linear(key, fan_in, fan_out):
    # PyTorch nn.Linear-style uniform(-1/sqrt(fan_in), 1/sqrt(fan_in)) init.
    kw, kb = jax.random.split(key)
    bound = 1.0 / (fan_in ** 0.5)
    w = jax.random.uniform(kw, (fan_in, fan_out), jnp.float32, -bound, bound)
    b = jax.random.uniform(kb, (fan_out,), jnp.float32, -bound, bound)
    return w, b


if __name__ == "__main__":
    # Small shapes consistent with the module's forward: in -> h1 -> h2 -> out.
    batch, in_dim, n_hidden_1, n_hidden_2, out_dim = 8, 32, 64, 32, 16

    key = jax.random.PRNGKey(0)
    kx, k1, k2, k3 = jax.random.split(key, 4)

    x = jax.random.normal(kx, (batch, in_dim), jnp.float32)
    w1, b1 = _init_linear(k1, in_dim, n_hidden_1)
    w2, b2 = _init_linear(k2, n_hidden_1, n_hidden_2)
    w3, b3 = _init_linear(k3, n_hidden_2, out_dim)

    # One-time param prep (bf16 weights, (1,N) f32 biases), then fused forward.
    params = prepare_params(w1, b1, w2, b2, w3, b3)
    out = neural_network_forward(x, *params)
    out = jax.block_until_ready(out)

    # Pure-JAX f32 reference (kernel uses bf16 MXU operands -> looser tol).
    ref = jnp.maximum(x @ w1 + b1, 0.0)
    ref = jnp.maximum(ref @ w2 + b2, 0.0)
    ref = jnp.maximum(ref @ w3 + b3, 0.0)
    assert out.shape == (batch, out_dim)
    assert jnp.allclose(out, ref, atol=1e-2, rtol=1e-2), (
        float(jnp.max(jnp.abs(out - ref)))
    )

    print("KERNEL_OK")
</pallas_src>

<mosaic_0001>
module attributes {stable_mosaic.version = 11 : i64} {
  func.func @mlp_kernel(%arg0: i32, %arg1: memref<8x32xf32, #tpu.memory_space<vmem>>, %arg2: memref<32x64xbf16, #tpu.memory_space<vmem>>, %arg3: memref<1x64xf32, #tpu.memory_space<vmem>>, %arg4: memref<64x32xbf16, #tpu.memory_space<vmem>>, %arg5: memref<1x32xf32, #tpu.memory_space<vmem>>, %arg6: memref<32x16xbf16, #tpu.memory_space<vmem>>, %arg7: memref<1x16xf32, #tpu.memory_space<vmem>>, %arg8: memref<8x16xf32, #tpu.memory_space<vmem>>) attributes {dimension_semantics = [#tpu.dimension_semantics<parallel>], iteration_bounds = array<i64: 1>, scalar_prefetch = 0 : i64, scratch_operands = 0 : i64, tpu.core_type = #tpu.core_type<tc>, window_params = [{transform_indices = @transform_0, window_bounds = array<i64: 8, 32>}, {pipeline_mode = #tpu.pipeline_mode<synchronous>, transform_indices = @transform_1, window_bounds = array<i64: 32, 64>}, {pipeline_mode = #tpu.pipeline_mode<synchronous>, transform_indices = @transform_2, window_bounds = array<i64: 1, 64>}, {pipeline_mode = #tpu.pipeline_mode<synchronous>, transform_indices = @transform_3, window_bounds = array<i64: 64, 32>}, {pipeline_mode = #tpu.pipeline_mode<synchronous>, transform_indices = @transform_4, window_bounds = array<i64: 1, 32>}, {pipeline_mode = #tpu.pipeline_mode<synchronous>, transform_indices = @transform_5, window_bounds = array<i64: 32, 16>}, {pipeline_mode = #tpu.pipeline_mode<synchronous>, transform_indices = @transform_6, window_bounds = array<i64: 1, 16>}, {transform_indices = @transform_7, window_bounds = array<i64: 8, 16>}]} {
    %c0 = arith.constant 0 : index
    %c0_0 = arith.constant 0 : index
    %0 = vector.load %arg1[%c0, %c0_0] : memref<8x32xf32, #tpu.memory_space<vmem>>, vector<8x32xf32>
    %1 = arith.truncf %0 : vector<8x32xf32> to vector<8x32xbf16>
    %c0_1 = arith.constant 0 : index
    %c0_2 = arith.constant 0 : index
    %2 = vector.load %arg2[%c0_1, %c0_2] : memref<32x64xbf16, #tpu.memory_space<vmem>>, vector<32x64xbf16>
    %cst = arith.constant dense<0.000000e+00> : vector<8x64xf32>
    %3 = tpu.matmul %1, %2, %cst {dimension_numbers = #tpu.dot_dimension_numbers<[1], [0], [0], [1], [0, 0, 1, 1], [], []>} : vector<8x32xbf16>, vector<32x64xbf16>, vector<8x64xf32> -> vector<8x64xf32>
    %c0_3 = arith.constant 0 : index
    %c0_4 = arith.constant 0 : index
    %4 = vector.load %arg3[%c0_3, %c0_4] : memref<1x64xf32, #tpu.memory_space<vmem>>, vector<1x64xf32>
    %5 = vector.broadcast %4 : vector<1x64xf32> to vector<8x64xf32>
    %6 = arith.addf %3, %5 : vector<8x64xf32>
    %cst_5 = arith.constant 0.000000e+00 : f32
    %7 = vector.broadcast %cst_5 : f32 to vector<8x64xf32>
    %8 = arith.maximumf %6, %7 : vector<8x64xf32>
    %9 = arith.truncf %8 : vector<8x64xf32> to vector<8x64xbf16>
    %c0_6 = arith.constant 0 : index
    %c0_7 = arith.constant 0 : index
    %10 = vector.load %arg4[%c0_6, %c0_7] : memref<64x32xbf16, #tpu.memory_space<vmem>>, vector<64x32xbf16>
    %cst_8 = arith.constant dense<0.000000e+00> : vector<8x32xf32>
    %11 = tpu.matmul %9, %10, %cst_8 {dimension_numbers = #tpu.dot_dimension_numbers<[1], [0], [0], [1], [0, 0, 1, 1], [], []>} : vector<8x64xbf16>, vector<64x32xbf16>, vector<8x32xf32> -> vector<8x32xf32>
    %c0_9 = arith.constant 0 : index
    %c0_10 = arith.constant 0 : index
    %12 = vector.load %arg5[%c0_9, %c0_10] : memref<1x32xf32, #tpu.memory_space<vmem>>, vector<1x32xf32>
    %13 = vector.broadcast %12 : vector<1x32xf32> to vector<8x32xf32>
    %14 = arith.addf %11, %13 : vector<8x32xf32>
    %cst_11 = arith.constant 0.000000e+00 : f32
    %15 = vector.broadcast %cst_11 : f32 to vector<8x32xf32>
    %16 = arith.maximumf %14, %15 : vector<8x32xf32>
    %17 = arith.truncf %16 : vector<8x32xf32> to vector<8x32xbf16>
    %c0_12 = arith.constant 0 : index
    %c0_13 = arith.constant 0 : index
    %18 = vector.load %arg6[%c0_12, %c0_13] : memref<32x16xbf16, #tpu.memory_space<vmem>>, vector<32x16xbf16>
    %cst_14 = arith.constant dense<0.000000e+00> : vector<8x16xf32>
    %19 = tpu.matmul %17, %18, %cst_14 {dimension_numbers = #tpu.dot_dimension_numbers<[1], [0], [0], [1], [0, 0, 1, 1], [], []>} : vector<8x32xbf16>, vector<32x16xbf16>, vector<8x16xf32> -> vector<8x16xf32>
    %c0_15 = arith.constant 0 : index
    %c0_16 = arith.constant 0 : index
    %20 = vector.load %arg7[%c0_15, %c0_16] : memref<1x16xf32, #tpu.memory_space<vmem>>, vector<1x16xf32>
    %21 = vector.broadcast %20 : vector<1x16xf32> to vector<8x16xf32>
    %22 = arith.addf %19, %21 : vector<8x16xf32>
    %cst_17 = arith.constant 0.000000e+00 : f32
    %23 = vector.broadcast %cst_17 : f32 to vector<8x16xf32>
    %24 = arith.maximumf %22, %23 : vector<8x16xf32>
    %c0_18 = arith.constant 0 : index
    %c0_19 = arith.constant 0 : index
    %25 = vector.load %arg8[%c0_18, %c0_19] : memref<8x16xf32, #tpu.memory_space<vmem>>, vector<8x16xf32>
    tpu.vector_store %arg8[%c0_18, %c0_19], %24 {strides = array<i32>} : memref<8x16xf32, #tpu.memory_space<vmem>>, vector<8x16xf32>,
    return
  }
  func.func @transform_0(%arg0: i32) -> (i32, i32) {
    %c0_i32 = arith.constant 0 : i32
    %c0_i32_0 = arith.constant 0 : i32
    return %arg0, %c0_i32 : i32, i32
  }
  func.func @transform_1(%arg0: i32) -> (i32, i32) {
    %c0_i32 = arith.constant 0 : i32
    %c0_i32_0 = arith.constant 0 : i32
    %c0_i32_1 = arith.constant 0 : i32
    return %c0_i32, %c0_i32_0 : i32, i32
  }
  func.func @transform_2(%arg0: i32) -> (i32, i32) {
    %c0_i32 = arith.constant 0 : i32
    %c0_i32_0 = arith.constant 0 : i32
    %c0_i32_1 = arith.constant 0 : i32
    return %c0_i32, %c0_i32_0 : i32, i32
  }
  func.func @transform_3(%arg0: i32) -> (i32, i32) {
    %c0_i32 = arith.constant 0 : i32
    %c0_i32_0 = arith.constant 0 : i32
    %c0_i32_1 = arith.constant 0 : i32
    return %c0_i32, %c0_i32_0 : i32, i32
  }
  func.func @transform_4(%arg0: i32) -> (i32, i32) {
    %c0_i32 = arith.constant 0 : i32
    %c0_i32_0 = arith.constant 0 : i32
    %c0_i32_1 = arith.constant 0 : i32
    return %c0_i32, %c0_i32_0 : i32, i32
  }
  func.func @transform_5(%arg0: i32) -> (i32, i32) {
    %c0_i32 = arith.constant 0 : i32
    %c0_i32_0 = arith.constant 0 : i32
    %c0_i32_1 = arith.constant 0 : i32
    return %c0_i32, %c0_i32_0 : i32, i32
  }
  func.func @transform_6(%arg0: i32) -> (i32, i32) {
    %c0_i32 = arith.constant 0 : i32
    %c0_i32_0 = arith.constant 0 : i32
    %c0_i32_1 = arith.constant 0 : i32
    return %c0_i32, %c0_i32_0 : i32, i32
  }
  func.func @transform_7(%arg0: i32) -> (i32, i32) {
    %c0_i32 = arith.constant 0 : i32
    %c0_i32_0 = arith.constant 0 : i32
    return %arg0, %c0_i32 : i32, i32
  }
}

</mosaic_0001>

<llo_original>
// kernel: neural_network_forward.1
$region0: #{neural_network_forward.1}
  #allocation0 [shape = 'u32[]', space=smem, size = 0x4, offset = 0x4, fixed_abs, tag = 'smem constant byte address 0x4 - core index']
  #allocation1 [shape = 'u32[144,128]{1,0:T(1,128)}', space=vmem, size = 0x12000, scoped, tag = 'internal scratch']
  %s0 = inlined_call_operand.vmem [shape: f32[8,32], index: 0, kind: input, shape index: {}]
  %s1 = inlined_call_operand.vmem [shape: bf16[32,64], index: 1, kind: input, shape index: {}]
  %s2 = inlined_call_operand.vmem [shape: f32[1,64], index: 2, kind: input, shape index: {}]
  %s3 = inlined_call_operand.vmem [shape: bf16[64,32], index: 3, kind: input, shape index: {}]
  %s4 = inlined_call_operand.vmem [shape: f32[1,32], index: 4, kind: input, shape index: {}]
  %s5 = inlined_call_operand.vmem [shape: bf16[32,16], index: 5, kind: input, shape index: {}]
  %s6 = inlined_call_operand.vmem [shape: f32[1,16], index: 6, kind: input, shape index: {}]
  %s7 = inlined_call_operand.hbm [shape: f32[8,16], index: 7, kind: output, shape index: {}]
  %s8 = sld [smem:[#allocation0]]
  $region38: #{neural_network_forward.1} parent=0
    _
  %s10 = ssub.s32 1, %s8
  %s11 = scalar_select 0, %s10, %s8
  $region1: #{neural_network_forward.1} parent=0
    #allocation2 [shape = 'u8[4096]{0}', space=vmem, size = 0x1000, scoped, tag = 'output window, operand 0, single buffered']
    #allocation3 [shape = 's32[1]{0}', space=sflag, size = 0x4, scoped, tag = 'scoped memory for neural_network_forward.1']
    %12 = vsyncpa [#allocation3], 0
    // Predicated region
    $region2: #{neural_network_forward.1} parent=1 // pred_check
      _
    $region3: #{neural_network_forward.1} parent=1 // pred_check_branch
      %14 = sbr.rel (0) target = $region5
    $region4: #{neural_network_forward.1} parent=1 // pred_region
      _
    $region5: #{neural_network_forward.1} parent=1 // pred_fallthru
      _
    // Predicated region
    $region6: #{neural_network_forward.1} parent=1 // pred_check
      _
    $region7: #{neural_network_forward.1} parent=1 // pred_check_branch
      %16 = sbr.rel (0) target = $region9
    $region8: #{neural_network_forward.1} parent=1 // pred_region
      _
    $region9: #{neural_network_forward.1} parent=1 // pred_fallthru
      _
    // Predicated region
    $region10: #{neural_network_forward.1} parent=1 // pred_check
      _
    $region11: #{neural_network_forward.1} parent=1 // pred_check_branch
      %18 = sbr.rel (0) target = $region13
    $region12: #{neural_network_forward.1} parent=1 // pred_region
      _
    $region13: #{neural_network_forward.1} parent=1 // pred_fallthru
      _
    // Predicated region
    $region14: #{neural_network_forward.1} parent=1 // pred_check
      _
    $region15: #{neural_network_forward.1} parent=1 // pred_check_branch
      %20 = sbr.rel (0) target = $region17
    $region16: #{neural_network_forward.1} parent=1 // pred_region
      _
    $region17: #{neural_network_forward.1} parent=1 // pred_fallthru
      _
    // Predicated region
    $region18: #{neural_network_forward.1} parent=1 // pred_check
      _
    $region19: #{neural_network_forward.1} parent=1 // pred_check_branch
      %22 = sbr.rel (0) target = $region21
    $region20: #{neural_network_forward.1} parent=1 // pred_region
      _
    $region21: #{neural_network_forward.1} parent=1 // pred_fallthru
      _
    // Predicated region
    $region22: #{neural_network_forward.1} parent=1 // pred_check
      _
    $region23: #{neural_network_forward.1} parent=1 // pred_check_branch
      %24 = sbr.rel (0) target = $region25
    $region24: #{neural_network_forward.1} parent=1 // pred_region
      _
    $region25: #{neural_network_forward.1} parent=1 // pred_fallthru
      _
    // Predicated region
    $region26: #{neural_network_forward.1} parent=1 // pred_check
      _
    $region27: #{neural_network_forward.1} parent=1 // pred_check_branch
      %26 = sbr.rel (0) target = $region29
    $region28: #{neural_network_forward.1} parent=1 // pred_region
      _
    $region29: #{neural_network_forward.1} parent=1 // pred_fallthru
      _
    %v28 = vld [vmem:[%s0] sm:$0xff]
    %v29 = vpack.c.bf16 %v28, %v28
    %v30 = vld [vmem:[%s1] sm:$0xf]
    %v31 = vld [vmem:[%s1 + $0x4] sm:$0xf]
    %v32 = vld [vmem:[%s1 + $0x8] sm:$0xf]
    %v33 = vld [vmem:[%s1 + $0xc] sm:$0xf]
    %v34 = vld [vmem:[%s2] sm:$0x1]
    %v36 = vlaneseq
    %v37 = vshrl.u32 %v36, 7
    %v38 = vsub.s32 0, %v37
    %v39 = vrot.slane %v34, %v38
    %v45 = vunpack.c.l.b16 %v30
    %v46 = vunpack.c.l.b16 %v31
    %v47 = vunpack.c.l.b16 %v32
    %v48 = vunpack.c.l.b16 %v33
    %v49 = vpack.c.b16 %v46, %v45
    %v50 = vpack.c.b16 %v48, %v47
    %vm53 = vcmask 261120
    %v55 = vsel %vm53, %v29, 0
    %57 = vmatprep.subr.bf16.mxu0 0
    %58 = vmatpush1.bf16.msra.mxu0 %v49
    %59 = vmatprep.subr.bf16.mxu0 0
    %60 = vmatpush1.bf16.msra.mxu0 %v50
    %61 = vmatprep.subr.bf16.mxu0 0
    %62 = vmatpush1.bf16.msra.mxu0 0
    %63 = vmatprep.subr.bf16.mxu0 0
    %64 = vmatpush1.bf16.msra.mxu0 0
    %65 = vmatprep.subr.bf16.mxu0 0
    %66 = vmatpush1.bf16.msra.mxu0 0
    %67 = vmatprep.subr.bf16.mxu0 0
    %68 = vmatpush1.bf16.msra.mxu0 0
    %69 = vmatprep.subr.bf16.mxu0 0
    %70 = vmatpush1.bf16.msra.mxu0 0
    %71 = vmatprep.subr.bf16.mxu0 0
    %72 = vmatpush1.bf16.msra.mxu0 0
    %73 = vmatprep.subr.bf16.mxu0 0
    %74 = vmatpush1.bf16.msra.mxu0 0
    %75 = vmatprep.subr.bf16.mxu0 0
    %76 = vmatpush1.bf16.msra.mxu0 0
    %77 = vmatprep.subr.bf16.mxu0 0
    %78 = vmatpush1.bf16.msra.mxu0 0
    %79 = vmatprep.subr.bf16.mxu0 0
    %80 = vmatpush1.bf16.msra.mxu0 0
    %81 = vmatprep.subr.bf16.mxu0 0
    %82 = vmatpush1.bf16.msra.mxu0 0
    %83 = vmatprep.subr.bf16.mxu0 0
    %84 = vmatpush1.bf16.msra.mxu0 0
    %85 = vmatprep.subr.bf16.mxu0 0
    %86 = vmatpush1.bf16.msra.mxu0 0
    %87 = vmatprep.subr.bf16.mxu0 0
    %88 = vmatpush1.bf16.msra.mxu0 0
    %89 = vmatprep.mubr.bf16.mxu0 0
    %90 = vmatmul.mubr.bf16.gmra.mrb[0].mxu0 %v55
    %v91 = vpop.f32.mrb[0].mxu0
    %v92 = vadd.f32 %v39, %v91
    %v93 = vpop.f32.mrb[0].mxu0
    %v94 = vpop.f32.mrb[0].mxu0
    %v95 = vpop.f32.mrb[0].mxu0
    %96 = vdwg.mxu0
    %v97 = vmax.f32 %v92, 0.0
    %v98 = vpack.c.bf16 %v97, %v97
    %v99 = vld [vmem:[%s3] sm:$0xf]
    %v100 = vld [vmem:[%s3 + $0x4] sm:$0xf]
    %v101 = vld [vmem:[%s3 + $0x8] sm:$0xf]
    %v102 = vld [vmem:[%s3 + $0xc] sm:$0xf]
    %v103 = vld [vmem:[%s3 + $0x10] sm:$0xf]
    %v104 = vld [vmem:[%s3 + $0x14] sm:$0xf]
    %v105 = vld [vmem:[%s3 + $0x18] sm:$0xf]
    %v106 = vld [vmem:[%s3 + $0x1c] sm:$0xf]
    %v107 = vld [vmem:[%s4] sm:$0x1]
    %v109 = vlaneseq
    %v110 = vshrl.u32 %v109, 7
    %v111 = vsub.s32 0, %v110
    %v112 = vrot.slane %v107, %v111
    %v122 = vunpack.c.l.b16 %v99
    %v123 = vunpack.c.l.b16 %v100
    %v124 = vunpack.c.l.b16 %v101
    %v125 = vunpack.c.l.b16 %v102
    %v126 = vunpack.c.l.b16 %v103
    %v127 = vunpack.c.l.b16 %v104
    %v128 = vunpack.c.l.b16 %v105
    %v129 = vunpack.c.l.b16 %v106
    %v130 = vpack.c.b16 %v123, %v122
    %v131 = vpack.c.b16 %v125, %v124
    %v132 = vpack.c.b16 %v127, %v126
    %v133 = vpack.c.b16 %v129, %v128
    %vm138 = vcmask 523264
    %v140 = vsel %vm138, %v98, 0
    %142 = vmatprep.subr.bf16.mxu0 0
    %143 = vmatpush1.bf16.msra.mxu0 %v130
    %144 = vmatprep.subr.bf16.mxu0 0
    %145 = vmatpush1.bf16.msra.mxu0 %v131
    %146 = vmatprep.subr.bf16.mxu0 0
    %147 = vmatpush1.bf16.msra.mxu0 %v132
    %148 = vmatprep.subr.bf16.mxu0 0
    %149 = vmatpush1.bf16.msra.mxu0 %v133
    %150 = vmatprep.subr.bf16.mxu0 0
    %151 = vmatpush1.bf16.msra.mxu0 0
    %152 = vmatprep.subr.bf16.mxu0 0
    %153 = vmatpush1.bf16.msra.mxu0 0
    %154 = vmatprep.subr.bf16.mxu0 0
    %155 = vmatpush1.bf16.msra.mxu0 0
    %156 = vmatprep.subr.bf16.mxu0 0
    %157 = vmatpush1.bf16.msra.mxu0 0
    %158 = vmatprep.subr.bf16.mxu0 0
    %159 = vmatpush1.bf16.msra.mxu0 0
    %160 = vmatprep.subr.bf16.mxu0 0
    %161 = vmatpush1.bf16.msra.mxu0 0
    %162 = vmatprep.subr.bf16.mxu0 0
    %163 = vmatpush1.bf16.msra.mxu0 0
    %164 = vmatprep.subr.bf16.mxu0 0
    %165 = vmatpush1.bf16.msra.mxu0 0
    %166 = vmatprep.subr.bf16.mxu0 0
    %167 = vmatpush1.bf16.msra.mxu0 0
    %168 = vmatprep.subr.bf16.mxu0 0
    %169 = vmatpush1.bf16.msra.mxu0 0
    %170 = vmatprep.subr.bf16.mxu0 0
    %171 = vmatpush1.bf16.msra.mxu0 0
    %172 = vmatprep.subr.bf16.mxu0 0
    %173 = vmatpush1.bf16.msra.mxu0 0
    %174 = vmatprep.mubr.bf16.mxu0 0
    %175 = vmatmul.mubr.bf16.gmra.mrb[0].mxu0 %v140
    %v176 = vpop.f32.mrb[0].mxu0
    %v177 = vadd.f32 %v112, %v176
    %v178 = vpop.f32.mrb[0].mxu0
    %v179 = vpop.f32.mrb[0].mxu0
    %v180 = vpop.f32.mrb[0].mxu0
    %181 = vdwg.mxu0
    %v182 = vmax.f32 %v177, 0.0
    %v183 = vpack.c.bf16 %v182, %v182
    %v184 = vld [vmem:[%s5] sm:$0xf]
    %v185 = vld [vmem:[%s5 + $0x4] sm:$0xf]
    %v186 = vld [vmem:[%s5 + $0x8] sm:$0xf]
    %v187 = vld [vmem:[%s5 + $0xc] sm:$0xf]
    %v188 = vld [vmem:[%s6] sm:$0x1]
    %v190 = vlaneseq
    %v191 = vshrl.u32 %v190, 7
    %v192 = vsub.s32 0, %v191
    %v193 = vrot.slane %v188, %v192
    %v199 = vunpack.c.l.b16 %v184
    %v200 = vunpack.c.l.b16 %v185
    %v201 = vunpack.c.l.b16 %v186
    %v202 = vunpack.c.l.b16 %v187
    %v203 = vpack.c.b16 %v200, %v199
    %v204 = vpack.c.b16 %v202, %v201
    %v208 = vsel %vm53, %v183, 0
    %210 = vmatprep.subr.bf16.mxu0 0
    %211 = vmatpush1.bf16.msra.mxu0 %v203
    %212 = vmatprep.subr.bf16.mxu0 0
    %213 = vmatpush1.bf16.msra.mxu0 %v204
    %214 = vmatprep.subr.bf16.mxu0 0
    %215 = vmatpush1.bf16.msra.mxu0 0
    %216 = vmatprep.subr.bf16.mxu0 0
    %217 = vmatpush1.bf16.msra.mxu0 0
    %218 = vmatprep.subr.bf16.mxu0 0
    %219 = vmatpush1.bf16.msra.mxu0 0
    %220 = vmatprep.subr.bf16.mxu0 0
    %221 = vmatpush1.bf16.msra.mxu0 0
    %222 = vmatprep.subr.bf16.mxu0 0
    %223 = vmatpush1.bf16.msra.mxu0 0
    %224 = vmatprep.subr.bf16.mxu0 0
    %225 = vmatpush1.bf16.msra.mxu0 0
    %226 = vmatprep.subr.bf16.mxu0 0
    %227 = vmatpush1.bf16.msra.mxu0 0
    %228 = vmatprep.subr.bf16.mxu0 0
    %229 = vmatpush1.bf16.msra.mxu0 0
    %230 = vmatprep.subr.bf16.mxu0 0
    %231 = vmatpush1.bf16.msra.mxu0 0
    %232 = vmatprep.subr.bf16.mxu0 0
    %233 = vmatpush1.bf16.msra.mxu0 0
    %234 = vmatprep.subr.bf16.mxu0 0
    %235 = vmatpush1.bf16.msra.mxu0 0
    %236 = vmatprep.subr.bf16.mxu0 0
    %237 = vmatpush1.bf16.msra.mxu0 0
    %238 = vmatprep.subr.bf16.mxu0 0
    %239 = vmatpush1.bf16.msra.mxu0 0
    %240 = vmatprep.subr.bf16.mxu0 0
    %241 = vmatpush1.bf16.msra.mxu0 0
    %242 = vmatprep.mubr.bf16.mxu0 0
    %243 = vmatmul.mubr.bf16.gmra.mrb[0].mxu0 %v208
    %v244 = vpop.f32.mrb[0].mxu0
    %v245 = vadd.f32 %v193, %v244
    %v246 = vpop.f32.mrb[0].mxu0
    %v247 = vpop.f32.mrb[0].mxu0
    %v248 = vpop.f32.mrb[0].mxu0
    %249 = vdwg.mxu0
    %v250 = vmax.f32 %v245, 0.0
    %vm251 = vcmask 130048
    %252 = vst.msk [vmem:[#allocation2] sm:$0xff] %vm251, %v250
    // Predicated region
    $region30: #{neural_network_forward.1} parent=1 // pred_check
      _
    $region31: #{neural_network_forward.1} parent=1 // pred_check_branch
      %254 = sbr.rel (0) target = $region33
    $region32: #{neural_network_forward.1} parent=1 // pred_region
      %s256 = ssub.s32 128, 128
      %257 = vsyncadd [#allocation3], %s256
      %s259 = sshll.u32 [#allocation2], 4
      %s260 = int_to_ptr.vmem [resolvable:$true] %s259
      %262 = dma.vmem_to_hbm [thread:$0]  %s260, 128, %s7, [#allocation3]
    $region33: #{neural_network_forward.1} parent=1 // pred_fallthru
      _
    // Predicated region
    $region34: #{neural_network_forward.1} parent=1 // pred_check
      _
    $region35: #{neural_network_forward.1} parent=1 // pred_check_branch
      %264 = sbr.rel (0) target = $region37
    $region36: #{neural_network_forward.1} parent=1 // pred_region
      %265 = dma.done [#allocation3], 128
    $region37: #{neural_network_forward.1} parent=1 // pred_fallthru
      _
    %266 = vsyncpa [#allocation3], 1

</llo_original>
